<compile_context>
chip_gen: v6e
topology: v6e:2x2x1
jax: 0.10.0
libtpu: 0.0.40
codegen_flags: <defaults>
</compile_context>

<pallas_src>
import jax
import jax.numpy as jnp
from jax.experimental import pallas as pl
from jax.experimental.pallas import tpu as pltpu


def bp_fnn_m_kernel(xT_ref, w1_ref, b1_ref, w2_ref, b2_ref, w3_ref, b3_ref,
                    out_ref):
    x = xT_ref[...]                                     # [18, TB] f32
    # layer_m: Linear(18,36) -> ReLU -> Linear(36,18) -> ReLU -> Linear(18,2).
    # Kept in f32 (bf16 MXU operands would break the 1e-5 fidelity check; with
    # K <= 36 these matmuls are fill/drain bound so bf16 would buy nothing).
    h1 = jnp.maximum(
        jnp.dot(w1_ref[...], x, preferred_element_type=jnp.float32)
        + b1_ref[...], 0.0)                             # [36, TB]
    h2 = jnp.maximum(
        jnp.dot(w2_ref[...], h1, preferred_element_type=jnp.float32)
        + b2_ref[...], 0.0)                             # [18, TB]
    out_ref[...] = (
        jnp.dot(w3_ref[...], h2, preferred_element_type=jnp.float32)
        + b3_ref[...])                                  # [2, TB], lane-dense store
    # TODO(synk): the torch NaN-check print side effect has no clean kernel
    # equivalent (and is unreachable: the normalization factor it guarded is 1).


def _choose_batch_tile(B, max_tb, min_blocks=2):
    """Lane-dense batch tile.

    * small B: one full-extent block (block dim == array dim, so the 128-lane
      divisibility rule does not apply).
    * large B: a multiple of 128, capped at max_tb (safe for v7x's 64 MiB VMEM)
      and chosen so the grid has >= min_blocks steps (feeds both v7x TCs).
    """
    if B <= 256:
        return B
    tb = min(max_tb, pl.cdiv(B, min_blocks))
    return max(128, (tb // 128) * 128)


def bp_fnn_m_forward(data, mu, sigma, w1, b1, w2, b2, w3, b3, *,
                     max_block_b=8192):
    """data [B, 18]; mu/sigma [R, 18]; w*/b* in torch layout ([out, in] / [out]).

    Returns [B, 2], matching the torch forward.  The rule-firing normalization
    the torch module multiplies by is identically 1, so mu/sigma cancel out of
    the result; they are kept in the signature for API parity with the module.
    """
    del mu, sigma  # normalization factor == 1 by construction (see header note)
    B, F = data.shape

    # Batch-on-lanes: transpose once in the wrapper (callers that can supply
    # feature-major data avoid even this copy).
    xT = data.T.astype(jnp.float32)                     # [F, B]
    b1c = b1.reshape(-1, 1).astype(jnp.float32)         # [36, 1]
    b2c = b2.reshape(-1, 1).astype(jnp.float32)         # [18, 1]
    b3c = b3.reshape(-1, 1).astype(jnp.float32)         # [2, 1]
    w1f = w1.astype(jnp.float32)                        # [36, 18]
    w2f = w2.astype(jnp.float32)                        # [18, 36]
    w3f = w3.astype(jnp.float32)                        # [2, 18]

    tb = _choose_batch_tile(B, max_block_b)
    grid = (pl.cdiv(B, tb),)
    resident = lambda i: (0, 0)                         # weights stay VMEM-resident

    outT = pl.pallas_call(
        bp_fnn_m_kernel,
        out_shape=jax.ShapeDtypeStruct((2, B), jnp.float32),
        grid=grid,
        in_specs=[
            pl.BlockSpec((F, tb), lambda i: (0, i)),    # x^T: batch-tiled on lanes
            pl.BlockSpec(w1f.shape, resident),
            pl.BlockSpec(b1c.shape, resident),
            pl.BlockSpec(w2f.shape, resident),
            pl.BlockSpec(b2c.shape, resident),
            pl.BlockSpec(w3f.shape, resident),
            pl.BlockSpec(b3c.shape, resident),
        ],
        out_specs=pl.BlockSpec((2, tb), lambda i: (0, i)),  # lane-dense output
        compiler_params=pltpu.CompilerParams(
            dimension_semantics=("parallel",),
            vmem_limit_bytes=32 * 1024 * 1024),
    )(xT, w1f, b1c, w2f, b2c, w3f, b3c)

    return outT.T                                       # [B, 2]


def _reference(data, mu, sigma, w1, b1, w2, b2, w3, b3):
    # Plain-JAX emulation of the full torch forward (fuzzify + normalize + TSK).
    # torch's `+ 1e-198` literal is double, promoting the firing strengths to
    # float64 so the normalizer never hits 0/inf; the log-domain softmax below
    # reproduces that behavior in f32.
    e = jnp.sum((data[:, None, :] - mu[None]) ** 2 / (2.0 * sigma[None] ** 2),
                axis=-1)                                # [B, R]
    e = e - jnp.min(e, axis=-1, keepdims=True)
    p = jnp.exp(-e)
    norm = p / jnp.sum(p, axis=-1, keepdims=True)       # rows sum to 1
    h1 = jnp.maximum(data @ w1.T + b1, 0.0)
    h2 = jnp.maximum(h1 @ w2.T + b2, 0.0)
    out3 = h2 @ w3.T + b3                               # [B, 2]
    return jnp.sum(norm[:, :, None] * out3[:, None, :], axis=1)


if __name__ == "__main__":
    B, n_rules, n_fea = 8, 16, 18   # n_fea fixed to 18 by Linear(18, 36)

    key = jax.random.PRNGKey(0)
    k = jax.random.split(key, 9)

    data = jax.random.normal(k[0], (B, n_fea), dtype=jnp.float32)
    # para_mu / para_sigma ~ U[0, 1) like torch.rand
    mu = jax.random.uniform(k[1], (n_rules, n_fea), dtype=jnp.float32)
    sigma = jax.random.uniform(k[2], (n_rules, n_fea), dtype=jnp.float32)

    def linear_init(kw, kb, fan_in, fan_out):
        bound = 1.0 / jnp.sqrt(jnp.float32(fan_in))
        w = jax.random.uniform(kw, (fan_out, fan_in), jnp.float32, -bound, bound)
        b = jax.random.uniform(kb, (fan_out,), jnp.float32, -bound, bound)
        return w, b

    w1, b1 = linear_init(k[3], k[4], 18, 36)
    w2, b2 = linear_init(k[5], k[6], 36, 18)
    w3, b3 = linear_init(k[7], k[8], 18, 2)

    out = bp_fnn_m_forward(data, mu, sigma, w1, b1, w2, b2, w3, b3)
    out = jax.block_until_ready(out)

    ref = _reference(data, mu, sigma, w1, b1, w2, b2, w3, b3)
    assert out.shape == (B, 2)
    assert jnp.allclose(out, ref, rtol=1e-5, atol=1e-5), (out, ref)

    print("KERNEL_OK")
</pallas_src>

<mosaic_0001>
module attributes {stable_mosaic.version = 11 : i64} {
  func.func @bp_fnn_m_kernel(%arg0: i32, %arg1: memref<18x8xf32, #tpu.memory_space<vmem>>, %arg2: memref<36x18xf32, #tpu.memory_space<vmem>>, %arg3: memref<36x1xf32, #tpu.memory_space<vmem>>, %arg4: memref<18x36xf32, #tpu.memory_space<vmem>>, %arg5: memref<18x1xf32, #tpu.memory_space<vmem>>, %arg6: memref<2x18xf32, #tpu.memory_space<vmem>>, %arg7: memref<2x1xf32, #tpu.memory_space<vmem>>, %arg8: memref<2x8xf32, #tpu.memory_space<vmem>>) attributes {dimension_semantics = [#tpu.dimension_semantics<parallel>], iteration_bounds = array<i64: 1>, scalar_prefetch = 0 : i64, scratch_operands = 0 : i64, tpu.core_type = #tpu.core_type<tc>, window_params = [{transform_indices = @transform_0, window_bounds = array<i64: 18, 8>}, {pipeline_mode = #tpu.pipeline_mode<synchronous>, transform_indices = @transform_1, window_bounds = array<i64: 36, 18>}, {pipeline_mode = #tpu.pipeline_mode<synchronous>, transform_indices = @transform_2, window_bounds = array<i64: 36, 1>}, {pipeline_mode = #tpu.pipeline_mode<synchronous>, transform_indices = @transform_3, window_bounds = array<i64: 18, 36>}, {pipeline_mode = #tpu.pipeline_mode<synchronous>, transform_indices = @transform_4, window_bounds = array<i64: 18, 1>}, {pipeline_mode = #tpu.pipeline_mode<synchronous>, transform_indices = @transform_5, window_bounds = array<i64: 2, 18>}, {pipeline_mode = #tpu.pipeline_mode<synchronous>, transform_indices = @transform_6, window_bounds = array<i64: 2, 1>}, {transform_indices = @transform_7, window_bounds = array<i64: 2, 8>}]} {
    %c0 = arith.constant 0 : index
    %c0_0 = arith.constant 0 : index
    %0 = vector.load %arg1[%c0, %c0_0] : memref<18x8xf32, #tpu.memory_space<vmem>>, vector<18x8xf32>
    %c0_1 = arith.constant 0 : index
    %c0_2 = arith.constant 0 : index
    %1 = vector.load %arg2[%c0_1, %c0_2] : memref<36x18xf32, #tpu.memory_space<vmem>>, vector<36x18xf32>
    %cst = arith.constant dense<0.000000e+00> : vector<36x8xf32>
    %2 = tpu.matmul %1, %0, %cst {dimension_numbers = #tpu.dot_dimension_numbers<[1], [0], [0], [1], [0, 0, 1, 1], [], []>} : vector<36x18xf32>, vector<18x8xf32>, vector<36x8xf32> -> vector<36x8xf32>
    %c0_3 = arith.constant 0 : index
    %c0_4 = arith.constant 0 : index
    %3 = vector.load %arg3[%c0_3, %c0_4] : memref<36x1xf32, #tpu.memory_space<vmem>>, vector<36x1xf32>
    %4 = vector.broadcast %3 : vector<36x1xf32> to vector<36x8xf32>
    %5 = arith.addf %2, %4 : vector<36x8xf32>
    %cst_5 = arith.constant 0.000000e+00 : f32
    %6 = vector.broadcast %cst_5 : f32 to vector<36x8xf32>
    %7 = arith.maximumf %5, %6 : vector<36x8xf32>
    %c0_6 = arith.constant 0 : index
    %c0_7 = arith.constant 0 : index
    %8 = vector.load %arg4[%c0_6, %c0_7] : memref<18x36xf32, #tpu.memory_space<vmem>>, vector<18x36xf32>
    %cst_8 = arith.constant dense<0.000000e+00> : vector<18x8xf32>
    %9 = tpu.matmul %8, %7, %cst_8 {dimension_numbers = #tpu.dot_dimension_numbers<[1], [0], [0], [1], [0, 0, 1, 1], [], []>} : vector<18x36xf32>, vector<36x8xf32>, vector<18x8xf32> -> vector<18x8xf32>
    %c0_9 = arith.constant 0 : index
    %c0_10 = arith.constant 0 : index
    %10 = vector.load %arg5[%c0_9, %c0_10] : memref<18x1xf32, #tpu.memory_space<vmem>>, vector<18x1xf32>
    %11 = vector.broadcast %10 : vector<18x1xf32> to vector<18x8xf32>
    %12 = arith.addf %9, %11 : vector<18x8xf32>
    %cst_11 = arith.constant 0.000000e+00 : f32
    %13 = vector.broadcast %cst_11 : f32 to vector<18x8xf32>
    %14 = arith.maximumf %12, %13 : vector<18x8xf32>
    %c0_12 = arith.constant 0 : index
    %c0_13 = arith.constant 0 : index
    %15 = vector.load %arg6[%c0_12, %c0_13] : memref<2x18xf32, #tpu.memory_space<vmem>>, vector<2x18xf32>
    %cst_14 = arith.constant dense<0.000000e+00> : vector<2x8xf32>
    %16 = tpu.matmul %15, %14, %cst_14 {dimension_numbers = #tpu.dot_dimension_numbers<[1], [0], [0], [1], [0, 0, 1, 1], [], []>} : vector<2x18xf32>, vector<18x8xf32>, vector<2x8xf32> -> vector<2x8xf32>
    %c0_15 = arith.constant 0 : index
    %c0_16 = arith.constant 0 : index
    %17 = vector.load %arg7[%c0_15, %c0_16] : memref<2x1xf32, #tpu.memory_space<vmem>>, vector<2x1xf32>
    %18 = vector.broadcast %17 : vector<2x1xf32> to vector<2x8xf32>
    %19 = arith.addf %16, %18 : vector<2x8xf32>
    %c0_17 = arith.constant 0 : index
    %c0_18 = arith.constant 0 : index
    %20 = vector.load %arg8[%c0_17, %c0_18] : memref<2x8xf32, #tpu.memory_space<vmem>>, vector<2x8xf32>
    tpu.vector_store %arg8[%c0_17, %c0_18], %19 {strides = array<i32>} : memref<2x8xf32, #tpu.memory_space<vmem>>, vector<2x8xf32>,
    return
  }
  func.func @transform_0(%arg0: i32) -> (i32, i32) {
    %c0_i32 = arith.constant 0 : i32
    %c0_i32_0 = arith.constant 0 : i32
    return %c0_i32, %arg0 : i32, i32
  }
  func.func @transform_1(%arg0: i32) -> (i32, i32) {
    %c0_i32 = arith.constant 0 : i32
    %c0_i32_0 = arith.constant 0 : i32
    %c0_i32_1 = arith.constant 0 : i32
    return %c0_i32, %c0_i32_0 : i32, i32
  }
  func.func @transform_2(%arg0: i32) -> (i32, i32) {
    %c0_i32 = arith.constant 0 : i32
    %c0_i32_0 = arith.constant 0 : i32
    %c0_i32_1 = arith.constant 0 : i32
    return %c0_i32, %c0_i32_0 : i32, i32
  }
  func.func @transform_3(%arg0: i32) -> (i32, i32) {
    %c0_i32 = arith.constant 0 : i32
    %c0_i32_0 = arith.constant 0 : i32
    %c0_i32_1 = arith.constant 0 : i32
    return %c0_i32, %c0_i32_0 : i32, i32
  }
  func.func @transform_4(%arg0: i32) -> (i32, i32) {
    %c0_i32 = arith.constant 0 : i32
    %c0_i32_0 = arith.constant 0 : i32
    %c0_i32_1 = arith.constant 0 : i32
    return %c0_i32, %c0_i32_0 : i32, i32
  }
  func.func @transform_5(%arg0: i32) -> (i32, i32) {
    %c0_i32 = arith.constant 0 : i32
    %c0_i32_0 = arith.constant 0 : i32
    %c0_i32_1 = arith.constant 0 : i32
    return %c0_i32, %c0_i32_0 : i32, i32
  }
  func.func @transform_6(%arg0: i32) -> (i32, i32) {
    %c0_i32 = arith.constant 0 : i32
    %c0_i32_0 = arith.constant 0 : i32
    %c0_i32_1 = arith.constant 0 : i32
    return %c0_i32, %c0_i32_0 : i32, i32
  }
  func.func @transform_7(%arg0: i32) -> (i32, i32) {
    %c0_i32 = arith.constant 0 : i32
    %c0_i32_0 = arith.constant 0 : i32
    return %c0_i32, %arg0 : i32, i32
  }
}

</mosaic_0001>

<llo_original>
// kernel: tpu_custom_call.1
$region0: #{tpu_custom_call.1}
  #allocation0 [shape = 'u32[]', space=smem, size = 0x4, offset = 0x4, fixed_abs, tag = 'smem constant byte address 0x4 - core index']
  #allocation1 [shape = 'u32[144,128]{1,0:T(1,128)}', space=vmem, size = 0x12000, scoped, tag = 'internal scratch']
  %s0 = inlined_call_operand.vmem [shape: f32[18,8], index: 0, kind: input, shape index: {}]
  %s1 = inlined_call_operand.vmem [shape: f32[36,18], index: 1, kind: input, shape index: {}]
  %s2 = inlined_call_operand.vmem [shape: f32[36,1], index: 2, kind: input, shape index: {}]
  %s3 = inlined_call_operand.vmem [shape: f32[18,36], index: 3, kind: input, shape index: {}]
  %s4 = inlined_call_operand.vmem [shape: f32[18,1], index: 4, kind: input, shape index: {}]
  %s5 = inlined_call_operand.vmem [shape: f32[2,18], index: 5, kind: input, shape index: {}]
  %s6 = inlined_call_operand.vmem [shape: f32[2,1], index: 6, kind: input, shape index: {}]
  %s7 = inlined_call_operand.hbm [shape: f32[2,8], index: 7, kind: output, shape index: {}]
  %s8 = sld [smem:[#allocation0]]
  $region38: #{tpu_custom_call.1} parent=0
    _
  %s10 = ssub.s32 1, %s8
  %s11 = scalar_select 0, %s10, %s8
  $region1: #{tpu_custom_call.1} parent=0
    #allocation2 [shape = 'u8[1024]{0}', space=vmem, size = 0x400, scoped, tag = 'output window, operand 0, single buffered']
    #allocation3 [shape = 's32[1]{0}', space=sflag, size = 0x4, scoped, tag = 'scoped memory for tpu_custom_call.1']
    %12 = vsyncpa [#allocation3], 0
    // Predicated region
    $region2: #{tpu_custom_call.1} parent=1 // pred_check
      _
    $region3: #{tpu_custom_call.1} parent=1 // pred_check_branch
      %14 = sbr.rel (0) target = $region5
    $region4: #{tpu_custom_call.1} parent=1 // pred_region
      _
    $region5: #{tpu_custom_call.1} parent=1 // pred_fallthru
      _
    // Predicated region
    $region6: #{tpu_custom_call.1} parent=1 // pred_check
      _
    $region7: #{tpu_custom_call.1} parent=1 // pred_check_branch
      %16 = sbr.rel (0) target = $region9
    $region8: #{tpu_custom_call.1} parent=1 // pred_region
      _
    $region9: #{tpu_custom_call.1} parent=1 // pred_fallthru
      _
    // Predicated region
    $region10: #{tpu_custom_call.1} parent=1 // pred_check
      _
    $region11: #{tpu_custom_call.1} parent=1 // pred_check_branch
      %18 = sbr.rel (0) target = $region13
    $region12: #{tpu_custom_call.1} parent=1 // pred_region
      _
    $region13: #{tpu_custom_call.1} parent=1 // pred_fallthru
      _
    // Predicated region
    $region14: #{tpu_custom_call.1} parent=1 // pred_check
      _
    $region15: #{tpu_custom_call.1} parent=1 // pred_check_branch
      %20 = sbr.rel (0) target = $region17
    $region16: #{tpu_custom_call.1} parent=1 // pred_region
      _
    $region17: #{tpu_custom_call.1} parent=1 // pred_fallthru
      _
    // Predicated region
    $region18: #{tpu_custom_call.1} parent=1 // pred_check
      _
    $region19: #{tpu_custom_call.1} parent=1 // pred_check_branch
      %22 = sbr.rel (0) target = $region21
    $region20: #{tpu_custom_call.1} parent=1 // pred_region
      _
    $region21: #{tpu_custom_call.1} parent=1 // pred_fallthru
      _
    // Predicated region
    $region22: #{tpu_custom_call.1} parent=1 // pred_check
      _
    $region23: #{tpu_custom_call.1} parent=1 // pred_check_branch
      %24 = sbr.rel (0) target = $region25
    $region24: #{tpu_custom_call.1} parent=1 // pred_region
      _
    $region25: #{tpu_custom_call.1} parent=1 // pred_fallthru
      _
    // Predicated region
    $region26: #{tpu_custom_call.1} parent=1 // pred_check
      _
    $region27: #{tpu_custom_call.1} parent=1 // pred_check_branch
      %26 = sbr.rel (0) target = $region29
    $region28: #{tpu_custom_call.1} parent=1 // pred_region
      _
    $region29: #{tpu_custom_call.1} parent=1 // pred_fallthru
      _
    %v27 = vld [vmem:[%s0] sm:$0xff]
    %v28 = vld [vmem:[%s0 + $0x8] sm:$0xff]
    %v29 = vld [vmem:[%s0 + $0x10] sm:$0x3]
    %v30 = vld [vmem:[%s1] sm:$0xff]
    %v31 = vld [vmem:[%s1 + $0x8] sm:$0xff]
    %v32 = vld [vmem:[%s1 + $0x10] sm:$0xff]
    %v33 = vld [vmem:[%s1 + $0x18] sm:$0xff]
    %v34 = vld [vmem:[%s1 + $0x20] sm:$0xf]
    %v35 = vld [vmem:[%s2] sm:$0xff]
    %v36 = vld [vmem:[%s2 + $0x8] sm:$0xff]
    %v37 = vld [vmem:[%s2 + $0x10] sm:$0xff]
    %v38 = vld [vmem:[%s2 + $0x18] sm:$0xff]
    %v39 = vld [vmem:[%s2 + $0x20] sm:$0xf]
    %41 = vset.pattern.permute.xlu0 0
    %42 = vperm.xlu0 %41, %v35
    %v43 = vpop.permute.xlu0 %42
    %46 = vset.pattern.permute.xlu0 0
    %47 = vperm.xlu0 %46, %v36
    %v48 = vpop.permute.xlu0 %47
    %51 = vset.pattern.permute.xlu0 0
    %52 = vperm.xlu0 %51, %v37
    %v53 = vpop.permute.xlu0 %52
    %56 = vset.pattern.permute.xlu0 0
    %57 = vperm.xlu0 %56, %v38
    %v58 = vpop.permute.xlu0 %57
    %61 = vset.pattern.permute.xlu0 0
    %62 = vperm.xlu0 %61, %v39
    %v63 = vpop.permute.xlu0 %62
    %vm65 = vcmask 146432
    %v67 = vsel %vm65, %v30, 0
    %v70 = vsel %vm65, %v31, 0
    %v73 = vsel %vm65, %v32, 0
    %v76 = vsel %vm65, %v33, 0
    %v79 = vsel %vm65, %v34, 0
    %vm81 = vcmask 1041408
    %v83 = vsel %vm81, %v29, 0
    %85 = vmatprep.subr.mxu0 0.0
    %86 = vmatpush1.msra.mxu0 0.0
    %87 = vmatprep.subr.mxu0 0.0
    %88 = vmatpush1.msra.mxu0 0.0
    %89 = vmatprep.subr.mxu0 0.0
    %90 = vmatpush1.msra.mxu0 0.0
    %91 = vmatprep.subr.mxu0 0.0
    %92 = vmatpush1.msra.mxu0 0.0
    %93 = vmatprep.subr.mxu0 0.0
    %94 = vmatpush1.msra.mxu0 0.0
    %95 = vmatprep.subr.mxu0 0.0
    %96 = vmatpush1.msra.mxu0 0.0
    %97 = vmatprep.subr.mxu0 0.0
    %98 = vmatpush1.msra.mxu0 0.0
    %99 = vmatprep.subr.mxu0 0.0
    %100 = vmatpush1.msra.mxu0 0.0
    %101 = vmatprep.subr.mxu0 0.0
    %102 = vmatpush1.msra.mxu0 0.0
    %103 = vmatprep.subr.mxu0 0.0
    %104 = vmatpush1.msra.mxu0 0.0
    %105 = vmatprep.subr.mxu0 0.0
    %106 = vmatpush1.msra.mxu0 0.0
    %107 = vmatprep.subr.mxu0 0.0
    %108 = vmatpush1.msra.mxu0 0.0
    %109 = vmatprep.subr.mxu0 0.0
    %110 = vmatpush1.msra.mxu0 0.0
    %111 = vmatprep.subr.mxu0 0.0
    %112 = vmatpush1.msra.mxu0 %v83
    %113 = vmatprep.subr.mxu0 0.0
    %114 = vmatpush1.msra.mxu0 %v28
    %115 = vmatprep.subr.mxu0 0.0
    %116 = vmatpush1.msra.mxu0 %v27
    %117 = vmatprep.subr.mxu0 0.0
    %118 = vmatpush2.msra.mxu0 0.0
    %119 = vmatprep.subr.mxu0 0.0
    %120 = vmatpush2.msra.mxu0 0.0
    %121 = vmatprep.subr.mxu0 0.0
    %122 = vmatpush2.msra.mxu0 0.0
    %123 = vmatprep.subr.mxu0 0.0
    %124 = vmatpush2.msra.mxu0 0.0
    %125 = vmatprep.subr.mxu0 0.0
    %126 = vmatpush2.msra.mxu0 0.0
    %127 = vmatprep.subr.mxu0 0.0
    %128 = vmatpush2.msra.mxu0 0.0
    %129 = vmatprep.subr.mxu0 0.0
    %130 = vmatpush2.msra.mxu0 0.0
    %131 = vmatprep.subr.mxu0 0.0
    %132 = vmatpush2.msra.mxu0 0.0
    %133 = vmatprep.subr.mxu0 0.0
    %134 = vmatpush2.msra.mxu0 0.0
    %135 = vmatprep.subr.mxu0 0.0
    %136 = vmatpush2.msra.mxu0 0.0
    %137 = vmatprep.subr.mxu0 0.0
    %138 = vmatpush2.msra.mxu0 0.0
    %139 = vmatprep.subr.mxu0 0.0
    %140 = vmatpush2.msra.mxu0 0.0
    %141 = vmatprep.subr.mxu0 0.0
    %142 = vmatpush2.msra.mxu0 0.0
    %143 = vmatprep.subr.mxu0 0.0
    %144 = vmatpush2.msra.mxu0 0.0
    %145 = vmatprep.subr.mxu0 0.0
    %146 = vmatpush2.msra.mxu0 0.0
    %147 = vmatprep.subr.mxu0 0.0
    %148 = vmatpush2.msra.mxu0 0.0
    %149 = vmatprep.mubr.f32.mxu0 0.0
    %150 = vmatmul.mubr.f32.gmra.mxu0 %v67
    %v151 = vpop.f32.mrf.mxu0
    %v152 = vadd.f32 %v43, %v151
    %v153 = vpop.f32.mrf.mxu0
    %154 = vmatprep.mubr.f32.mxu0 0.0
    %155 = vmatmul.mubr.f32.gmra.mxu0 %v70
    %v156 = vpop.f32.mrf.mxu0
    %v157 = vadd.f32 %v48, %v156
    %v158 = vpop.f32.mrf.mxu0
    %159 = vmatprep.mubr.f32.mxu0 0.0
    %160 = vmatmul.mubr.f32.gmra.mxu0 %v73
    %v161 = vpop.f32.mrf.mxu0
    %v162 = vadd.f32 %v53, %v161
    %v163 = vpop.f32.mrf.mxu0
    %164 = vmatprep.mubr.f32.mxu0 0.0
    %165 = vmatmul.mubr.f32.gmra.mxu0 %v76
    %v166 = vpop.f32.mrf.mxu0
    %v167 = vadd.f32 %v58, %v166
    %v168 = vpop.f32.mrf.mxu0
    %169 = vmatprep.mubr.f32.mxu0 0.0
    %170 = vmatmul.mubr.f32.gmra.mxu0 %v79
    %v171 = vpop.f32.mrf.mxu0
    %v172 = vadd.f32 %v63, %v171
    %v173 = vpop.f32.mrf.mxu0
    %174 = vdwg.mxu0
    %v175 = vmax.f32 %v152, 0.0
    %v176 = vmax.f32 %v157, 0.0
    %v177 = vmax.f32 %v162, 0.0
    %v178 = vmax.f32 %v167, 0.0
    %v179 = vmax.f32 %v172, 0.0
    %v180 = vld [vmem:[%s3] sm:$0xff]
    %v181 = vld [vmem:[%s3 + $0x8] sm:$0xff]
    %v182 = vld [vmem:[%s3 + $0x10] sm:$0x3]
    %v183 = vld [vmem:[%s4] sm:$0xff]
    %v184 = vld [vmem:[%s4 + $0x8] sm:$0xff]
    %v185 = vld [vmem:[%s4 + $0x10] sm:$0x3]
    %187 = vset.pattern.permute.xlu0 0
    %188 = vperm.xlu0 %187, %v183
    %v189 = vpop.permute.xlu0 %188
    %192 = vset.pattern.permute.xlu0 0
    %193 = vperm.xlu0 %192, %v184
    %v194 = vpop.permute.xlu0 %193
    %197 = vset.pattern.permute.xlu0 0
    %198 = vperm.xlu0 %197, %v185
    %v199 = vpop.permute.xlu0 %198
    %vm201 = vcmask 293888
    %v203 = vsel %vm201, %v180, 0
    %v206 = vsel %vm201, %v181, 0
    %v209 = vsel %vm201, %v182, 0
    %vm211 = vcmask 1043456
    %v213 = vsel %vm211, %v179, 0
    %215 = vmatprep.subr.mxu0 0.0
    %216 = vmatpush1.msra.mxu0 0.0
    %217 = vmatprep.subr.mxu0 0.0
    %218 = vmatpush1.msra.mxu0 0.0
    %219 = vmatprep.subr.mxu0 0.0
    %220 = vmatpush1.msra.mxu0 0.0
    %221 = vmatprep.subr.mxu0 0.0
    %222 = vmatpush1.msra.mxu0 0.0
    %223 = vmatprep.subr.mxu0 0.0
    %224 = vmatpush1.msra.mxu0 0.0
    %225 = vmatprep.subr.mxu0 0.0
    %226 = vmatpush1.msra.mxu0 0.0
    %227 = vmatprep.subr.mxu0 0.0
    %228 = vmatpush1.msra.mxu0 0.0
    %229 = vmatprep.subr.mxu0 0.0
    %230 = vmatpush1.msra.mxu0 0.0
    %231 = vmatprep.subr.mxu0 0.0
    %232 = vmatpush1.msra.mxu0 0.0
    %233 = vmatprep.subr.mxu0 0.0
    %234 = vmatpush1.msra.mxu0 0.0
    %235 = vmatprep.subr.mxu0 0.0
    %236 = vmatpush1.msra.mxu0 0.0
    %237 = vmatprep.subr.mxu0 0.0
    %238 = vmatpush1.msra.mxu0 %v213
    %239 = vmatprep.subr.mxu0 0.0
    %240 = vmatpush1.msra.mxu0 %v178
    %241 = vmatprep.subr.mxu0 0.0
    %242 = vmatpush1.msra.mxu0 %v177
    %243 = vmatprep.subr.mxu0 0.0
    %244 = vmatpush1.msra.mxu0 %v176
    %245 = vmatprep.subr.mxu0 0.0
    %246 = vmatpush1.msra.mxu0 %v175
    %247 = vmatprep.subr.mxu0 0.0
    %248 = vmatpush2.msra.mxu0 0.0
    %249 = vmatprep.subr.mxu0 0.0
    %250 = vmatpush2.msra.mxu0 0.0
    %251 = vmatprep.subr.mxu0 0.0
    %252 = vmatpush2.msra.mxu0 0.0
    %253 = vmatprep.subr.mxu0 0.0
    %254 = vmatpush2.msra.mxu0 0.0
    %255 = vmatprep.subr.mxu0 0.0
    %256 = vmatpush2.msra.mxu0 0.0
    %257 = vmatprep.subr.mxu0 0.0
    %258 = vmatpush2.msra.mxu0 0.0
    %259 = vmatprep.subr.mxu0 0.0
    %260 = vmatpush2.msra.mxu0 0.0
    %261 = vmatprep.subr.mxu0 0.0
    %262 = vmatpush2.msra.mxu0 0.0
    %263 = vmatprep.subr.mxu0 0.0
    %264 = vmatpush2.msra.mxu0 0.0
    %265 = vmatprep.subr.mxu0 0.0
    %266 = vmatpush2.msra.mxu0 0.0
    %267 = vmatprep.subr.mxu0 0.0
    %268 = vmatpush2.msra.mxu0 0.0
    %269 = vmatprep.subr.mxu0 0.0
    %270 = vmatpush2.msra.mxu0 0.0
    %271 = vmatprep.subr.mxu0 0.0
    %272 = vmatpush2.msra.mxu0 0.0
    %273 = vmatprep.subr.mxu0 0.0
    %274 = vmatpush2.msra.mxu0 0.0
    %275 = vmatprep.subr.mxu0 0.0
    %276 = vmatpush2.msra.mxu0 0.0
    %277 = vmatprep.subr.mxu0 0.0
    %278 = vmatpush2.msra.mxu0 0.0
    %279 = vmatprep.mubr.f32.mxu0 0.0
    %280 = vmatmul.mubr.f32.gmra.mxu0 %v203
    %v281 = vpop.f32.mrf.mxu0
    %v282 = vadd.f32 %v189, %v281
    %v283 = vpop.f32.mrf.mxu0
    %284 = vmatprep.mubr.f32.mxu0 0.0
    %285 = vmatmul.mubr.f32.gmra.mxu0 %v206
    %v286 = vpop.f32.mrf.mxu0
    %v287 = vadd.f32 %v194, %v286
    %v288 = vpop.f32.mrf.mxu0
    %289 = vmatprep.mubr.f32.mxu0 0.0
    %290 = vmatmul.mubr.f32.gmra.mxu0 %v209
    %v291 = vpop.f32.mrf.mxu0
    %v292 = vadd.f32 %v199, %v291
    %v293 = vpop.f32.mrf.mxu0
    %294 = vdwg.mxu0
    %v295 = vmax.f32 %v282, 0.0
    %v296 = vmax.f32 %v287, 0.0
    %v297 = vmax.f32 %v292, 0.0
    %v298 = vld [vmem:[%s5] sm:$0x3]
    %v299 = vld [vmem:[%s6] sm:$0x3]
    %301 = vset.pattern.permute.xlu0 0
    %302 = vperm.xlu0 %301, %v299
    %v303 = vpop.permute.xlu0 %302
    %v306 = vsel %vm65, %v298, 0
    %v309 = vsel %vm81, %v297, 0
    %311 = vmatprep.subr.mxu0 0.0
    %312 = vmatpush1.msra.mxu0 0.0
    %313 = vmatprep.subr.mxu0 0.0
    %314 = vmatpush1.msra.mxu0 0.0
    %315 = vmatprep.subr.mxu0 0.0
    %316 = vmatpush1.msra.mxu0 0.0
    %317 = vmatprep.subr.mxu0 0.0
    %318 = vmatpush1.msra.mxu0 0.0
    %319 = vmatprep.subr.mxu0 0.0
    %320 = vmatpush1.msra.mxu0 0.0
    %321 = vmatprep.subr.mxu0 0.0
    %322 = vmatpush1.msra.mxu0 0.0
    %323 = vmatprep.subr.mxu0 0.0
    %324 = vmatpush1.msra.mxu0 0.0
    %325 = vmatprep.subr.mxu0 0.0
    %326 = vmatpush1.msra.mxu0 0.0
    %327 = vmatprep.subr.mxu0 0.0
    %328 = vmatpush1.msra.mxu0 0.0
    %329 = vmatprep.subr.mxu0 0.0
    %330 = vmatpush1.msra.mxu0 0.0
    %331 = vmatprep.subr.mxu0 0.0
    %332 = vmatpush1.msra.mxu0 0.0
    %333 = vmatprep.subr.mxu0 0.0
    %334 = vmatpush1.msra.mxu0 0.0
    %335 = vmatprep.subr.mxu0 0.0
    %336 = vmatpush1.msra.mxu0 0.0
    %337 = vmatprep.subr.mxu0 0.0
    %338 = vmatpush1.msra.mxu0 %v309
    %339 = vmatprep.subr.mxu0 0.0
    %340 = vmatpush1.msra.mxu0 %v296
    %341 = vmatprep.subr.mxu0 0.0
    %342 = vmatpush1.msra.mxu0 %v295
    %343 = vmatprep.subr.mxu0 0.0
    %344 = vmatpush2.msra.mxu0 0.0
    %345 = vmatprep.subr.mxu0 0.0
    %346 = vmatpush2.msra.mxu0 0.0
    %347 = vmatprep.subr.mxu0 0.0
    %348 = vmatpush2.msra.mxu0 0.0
    %349 = vmatprep.subr.mxu0 0.0
    %350 = vmatpush2.msra.mxu0 0.0
    %351 = vmatprep.subr.mxu0 0.0
    %352 = vmatpush2.msra.mxu0 0.0
    %353 = vmatprep.subr.mxu0 0.0
    %354 = vmatpush2.msra.mxu0 0.0
    %355 = vmatprep.subr.mxu0 0.0
    %356 = vmatpush2.msra.mxu0 0.0
    %357 = vmatprep.subr.mxu0 0.0
    %358 = vmatpush2.msra.mxu0 0.0
    %359 = vmatprep.subr.mxu0 0.0
    %360 = vmatpush2.msra.mxu0 0.0
    %361 = vmatprep.subr.mxu0 0.0
    %362 = vmatpush2.msra.mxu0 0.0
    %363 = vmatprep.subr.mxu0 0.0
    %364 = vmatpush2.msra.mxu0 0.0
    %365 = vmatprep.subr.mxu0 0.0
    %366 = vmatpush2.msra.mxu0 0.0
    %367 = vmatprep.subr.mxu0 0.0
    %368 = vmatpush2.msra.mxu0 0.0
    %369 = vmatprep.subr.mxu0 0.0
    %370 = vmatpush2.msra.mxu0 0.0
    %371 = vmatprep.subr.mxu0 0.0
    %372 = vmatpush2.msra.mxu0 0.0
    %373 = vmatprep.subr.mxu0 0.0
    %374 = vmatpush2.msra.mxu0 0.0
    %375 = vmatprep.mubr.f32.mxu0 0.0
    %376 = vmatmul.mubr.f32.gmra.mxu0 %v306
    %v377 = vpop.f32.mrf.mxu0
    %v378 = vadd.f32 %v303, %v377
    %v379 = vpop.f32.mrf.mxu0
    %380 = vdwg.mxu0
    %vm381 = vcmask 58368
    %382 = vst.msk [vmem:[#allocation2] sm:$0x3] %vm381, %v378
    // Predicated region
    $region30: #{tpu_custom_call.1} parent=1 // pred_check
      _
    $region31: #{tpu_custom_call.1} parent=1 // pred_check_branch
      %384 = sbr.rel (0) target = $region33
    $region32: #{tpu_custom_call.1} parent=1 // pred_region
      %s386 = ssub.s32 32, 32
      %387 = vsyncadd [#allocation3], %s386
      %s389 = sshll.u32 [#allocation2], 4
      %s390 = int_to_ptr.vmem [resolvable:$true] %s389
      %392 = dma.vmem_to_hbm [thread:$0]  %s390, 32, %s7, [#allocation3]
    $region33: #{tpu_custom_call.1} parent=1 // pred_fallthru
      _
    // Predicated region
    $region34: #{tpu_custom_call.1} parent=1 // pred_check
      _
    $region35: #{tpu_custom_call.1} parent=1 // pred_check_branch
      %394 = sbr.rel (0) target = $region37
    $region36: #{tpu_custom_call.1} parent=1 // pred_region
      %395 = dma.done [#allocation3], 32
    $region37: #{tpu_custom_call.1} parent=1 // pred_fallthru
      _
    %396 = vsyncpa [#allocation3], 1

</llo_original>
